<compile_context>
chip_gen: v7x
topology: tpu7x:2x2x1
jax: 0.10.0
libtpu: 0.0.40
codegen_flags: <defaults>
</compile_context>

<pallas_src>
import functools
import math

import jax
import jax.numpy as jnp
import numpy as np
from jax.experimental import pallas as pl
from jax.experimental.pallas import tpu as pltpu


def _gather_row_sum_kernel(y_ref, x_ref, out_ref, acc_ref, *,
                           sb_per_chunk, num_blocks, ts1, s1, need_mask):
    """Accumulate sum_s X[n, y[n], s] over one chunk of the gathered class row.

    Grid = (chunk, n, sb).  For each (chunk, n) the spatial blocks sb are added
    elementwise into a (ts1, L) f32 scratch (pure VALU work); a single full
    reduce and scalar store happens only on the last spatial block.
    """
    ch = pl.program_id(0)
    sb = pl.program_id(2)

    @pl.when(sb == 0)
    def _():
        acc_ref[...] = jnp.zeros_like(acc_ref)

    x = x_ref[0, 0].astype(jnp.float32)                    # (ts1, L)

    if need_mask:
        blk = ch * sb_per_chunk + sb
        # Only the last real block can be ragged; blocks past num_blocks are
        # grid padding (their data is clamped to block num_blocks-1 by the
        # index_map) and are fully masked out here.
        is_tail = blk >= num_blocks - 1

        @pl.when(jnp.logical_not(is_tail))
        def _():
            acc_ref[...] += x                              # unmasked fast path

        @pl.when(is_tail)
        def _():
            row = (jax.lax.broadcasted_iota(jnp.int32, x.shape, 0) + blk * ts1)
            acc_ref[...] += jnp.where(row < s1, x, 0.0)
    else:
        acc_ref[...] += x

    @pl.when(sb == sb_per_chunk - 1)
    def _():
        out_ref[0, 0] = jnp.sum(acc_ref[...]).reshape(1, 1)


def _vmem_budgets():
    """Per-buffer block budget and VMEM limit, TPU-generation aware."""
    try:
        cap = int(pltpu.get_tpu_info().vmem_capacity_bytes)
    except Exception:
        cap = 64 * 1024 * 1024                  # conservative (v7x-sized) default
    if cap >= 100 * 1024 * 1024:                # v5e / v6e: 128 MiB per core
        block_budget, vmem_limit = 8 * 1024 * 1024, 80 * 1024 * 1024
    else:                                       # v7x: 64 MiB per core
        block_budget, vmem_limit = 4 * 1024 * 1024, 44 * 1024 * 1024
    return block_budget, min(vmem_limit, (cap * 3) // 4)


def _pallas_selected_row_sums(x4, y_i32, *, S1, L, lane_pad, itemsize,
                              block_budget, vmem_limit, max_block_sublanes):
    """Return sel_sums[n] = sum_s X[n, y[n], s], reading only the gathered rows."""
    N = int(x4.shape[0])

    # Sublane extent per block: fill the per-buffer budget (multiple of 8, or
    # the full S1 extent when it already fits).
    budget_sub = max(8, (block_budget // (lane_pad * itemsize)) // 8 * 8)
    if max_block_sublanes is not None:
        budget_sub = min(budget_sub, max(8, int(max_block_sublanes)))
    TS1 = S1 if S1 <= budget_sub else budget_sub
    NB = pl.cdiv(S1, TS1)                       # spatial blocks per gathered row

    # Guarantee >= 2 blocks on the parallel axes (v7x has 2 TensorCores) even
    # when the batch is 1: split the spatial extent into 2 parallel chunks.
    CH = 2 if (N < 2 and NB >= 2) else 1
    SB = pl.cdiv(NB, CH)                        # sequential blocks per chunk
    need_mask = (S1 % TS1 != 0) or (CH * SB != NB)

    def x_map(ch, n, sb, y_ref):
        # Data-dependent gather: only class row y[n] of sample n is ever DMA'd.
        blk = jnp.minimum(ch * SB + sb, NB - 1)     # clamp grid-padding blocks
        return (n, y_ref[n], blk, 0)

    def o_map(ch, n, sb, y_ref):
        return (n, ch, 0, 0)

    partial = pl.pallas_call(
        functools.partial(_gather_row_sum_kernel, sb_per_chunk=SB,
                          num_blocks=NB, ts1=TS1, s1=S1, need_mask=need_mask),
        out_shape=jax.ShapeDtypeStruct((N, CH, 1, 1), jnp.float32),
        grid_spec=pltpu.PrefetchScalarGridSpec(
            num_scalar_prefetch=1,
            grid=(CH, N, SB),
            in_specs=[pl.BlockSpec((1, 1, TS1, L), x_map)],
            out_specs=pl.BlockSpec((1, 1, 1, 1), o_map),
            scratch_shapes=[pltpu.VMEM((TS1, L), jnp.float32)],
        ),
        compiler_params=pltpu.CompilerParams(
            dimension_semantics=("parallel", "parallel", "arbitrary"),
            vmem_limit_bytes=vmem_limit),
    )(y_i32, x4)

    return partial.sum(axis=(1, 2, 3))          # (N,) per-sample chunk totals


@functools.partial(jax.jit, static_argnames=("max_mix", "max_block_sublanes"))
def balanced_ce_loss(X, y, rebalance, *, max_mix=0.75, max_block_sublanes=None):
    """Pallas implementation of BalancedCELoss.forward (rebalance=True path).

    Args:
      X: (N, C, *spatial) log-probabilities (float32 or bfloat16).
      y: (N,) integer class targets.
      rebalance: (C, 1) float32 running rebalance buffer (module state).
      max_block_sublanes: optional cap on the per-block sublane extent
        (testing hook to exercise the multi-block / masked / chunked paths).

    Returns:
      (scalar loss, new rebalance buffer of shape (C, 1)).
    """
    N, C = int(X.shape[0]), int(X.shape[1])
    S = int(np.prod(X.shape[2:])) if X.ndim > 2 else 1

    x3 = X.reshape(N, C, S)
    if x3.dtype not in (jnp.float32, jnp.bfloat16):
        x3 = x3.astype(jnp.float32)
    itemsize = x3.dtype.itemsize
    y_i32 = y.reshape(N).astype(jnp.int32)

    block_budget, vmem_limit = _vmem_budgets()

    # ---- copy-free factorization S = S1 * L (lanes on L) --------------------
    if S % 128 == 0:
        S1, L = S // 128, 128                   # sublane/lane dense (fast path)
    elif S * itemsize <= block_budget:
        S1, L = 1, S                            # whole gathered row in one block
    else:
        L = int(X.shape[-1]) if X.ndim > 2 else 1
        S1 = S // L                             # keep native innermost dim on lanes
    lane_pad = ((L + 127) // 128) * 128

    if lane_pad * itemsize > block_budget:
        # TODO(synk): pathological shape (huge, 128-indivisible innermost
        # spatial dim); not worth a dedicated Pallas path -- plain XLA gather.
        sel = jnp.take_along_axis(x3.astype(jnp.float32),
                                  y_i32.reshape(N, 1, 1), axis=1)
        sel_sums = sel.sum(axis=(1, 2))
    else:
        x4 = x3.reshape(N, C, S1, L)            # contiguous split -> no copy
        sel_sums = _pallas_selected_row_sums(
            x4, y_i32, S1=S1, L=L, lane_pad=lane_pad, itemsize=itemsize,
            block_budget=block_budget, vmem_limit=vmem_limit,
            max_block_sublanes=max_block_sublanes)

    # ---- tiny epilogue (plain jnp, fused by XLA): O(N*C + C) ----------------
    onehot = (y_i32[:, None] == jnp.arange(C, dtype=jnp.int32)[None, :]
              ).astype(jnp.float32)                             # (N, C)
    class_sum = -jnp.sum(onehot * sel_sums[:, None], axis=0)    # (C,) NLL sums
    counts = jnp.sum(onehot, axis=0) * jnp.float32(S)           # (C,) occurrences

    # chance CE is hard-coded to 3 logits in the PyTorch module: log(3).
    chance_ce = jnp.float32(math.log(3.0))

    empty = counts == 0.0
    class_occ = jnp.where(empty, 1.0, counts)
    balanced = jnp.where(empty, chance_ce, class_sum)

    reb = rebalance.astype(jnp.float32).reshape(C)
    mix_frac = jnp.float32(max_mix) * class_occ / jnp.sum(class_occ)
    mean_loss = (balanced / class_occ) ** 2
    norm_loss = mean_loss / jnp.sum(mean_loss)
    new_reb = (1.0 - mix_frac) * reb + mix_frac * norm_loss
    loss = jnp.sum(jnp.float32(C) * balanced * new_reb)

    return loss, new_reb.reshape(C, 1)


def _reference(X, y, rebalance, *, max_mix=0.75):
    """Pure-numpy reference mirroring the PyTorch module (rebalance=True)."""
    N, C = int(X.shape[0]), int(X.shape[1])
    S = int(np.prod(X.shape[2:])) if X.ndim > 2 else 1
    x3 = np.asarray(X, dtype=np.float32).reshape(N, C, S)
    y = np.asarray(y, dtype=np.int64).reshape(N)
    reb = np.asarray(rebalance, dtype=np.float32).reshape(C, 1)

    nll = -np.take_along_axis(x3, y.reshape(N, 1, 1), axis=1)[:, 0, :]  # (N, S)
    chance_ce = math.log(3.0)
    class_sum = np.zeros((C, 1), np.float32)
    class_occ = np.zeros((C, 1), np.float32)
    for c in range(C):
        ind = (y == c)
        occ = ind.sum() * S
        if occ == 0:
            class_occ[c] = 1.0
            class_sum[c] = chance_ce
        else:
            class_occ[c] = occ
            class_sum[c] = nll[ind].sum()
    mix_frac = max_mix * class_occ / class_occ.sum()
    mean_loss = (class_sum / class_occ) ** 2
    norm_loss = mean_loss / mean_loss.sum()
    new_reb = (1.0 - mix_frac) * reb + mix_frac * norm_loss
    loss = float((C * class_sum * new_reb).sum())
    return loss, new_reb


if __name__ == "__main__":
    key = jax.random.PRNGKey(0)
    kx1, ky1, kx2, ky2, kx3, ky3 = jax.random.split(key, 6)

    # --- test 1: f32, spatial 16x16 (S % 128 == 0, sublane/lane-dense path) --
    N, C, H, W = 2, 4, 16, 16
    logits = jax.random.normal(kx1, (N, C, H, W), dtype=jnp.float32)
    X = jax.nn.log_softmax(logits, axis=1)            # NLLLoss expects log-probs
    y = jax.random.randint(ky1, (N,), 0, C, dtype=jnp.int32)
    rebalance0 = (1.0 / C) * jnp.ones((C, 1), jnp.float32)   # module init state

    loss, new_reb = balanced_ce_loss(X, y, rebalance0)
    loss = jax.block_until_ready(loss)
    new_reb = jax.block_until_ready(new_reb)
    ref_loss, ref_reb = _reference(np.asarray(X), np.asarray(y),
                                   np.asarray(rebalance0))
    assert np.allclose(float(loss), ref_loss, rtol=1e-5, atol=1e-5), (loss, ref_loss)
    assert np.allclose(np.asarray(new_reb), ref_reb, rtol=1e-5, atol=1e-6)

    # --- test 2: bf16 streaming, ragged spatial (S % 128 != 0) ---------------
    H2, W2 = 17, 23
    logits2 = jax.random.normal(kx2, (N, C, H2, W2), dtype=jnp.float32)
    X2 = jax.nn.log_softmax(logits2, axis=1).astype(jnp.bfloat16)
    y2 = jax.random.randint(ky2, (N,), 0, C, dtype=jnp.int32)

    loss2, new_reb2 = balanced_ce_loss(X2, y2, rebalance0)
    loss2 = jax.block_until_ready(loss2)
    new_reb2 = jax.block_until_ready(new_reb2)
    ref_loss2, ref_reb2 = _reference(np.asarray(X2.astype(jnp.float32)),
                                     np.asarray(y2), np.asarray(rebalance0))
    assert np.allclose(float(loss2), ref_loss2, rtol=1e-4, atol=1e-4), (loss2, ref_loss2)
    assert np.allclose(np.asarray(new_reb2), ref_reb2, rtol=1e-4, atol=1e-5)

    # --- test 3: batch 1 -> 2-chunk parallel split + ragged sublane tail -----
    N3, C3, H3, W3 = 1, 3, 9, 128          # S1 = 9, forced TS1 = 8 -> 2 blocks
    logits3 = jax.random.normal(kx3, (N3, C3, H3, W3), dtype=jnp.float32)
    X3 = jax.nn.log_softmax(logits3, axis=1)
    y3 = jax.random.randint(ky3, (N3,), 0, C3, dtype=jnp.int32)
    reb3 = (1.0 / C3) * jnp.ones((C3, 1), jnp.float32)

    loss3, new_reb3 = balanced_ce_loss(X3, y3, reb3, max_block_sublanes=8)
    loss3 = jax.block_until_ready(loss3)
    new_reb3 = jax.block_until_ready(new_reb3)
    ref_loss3, ref_reb3 = _reference(np.asarray(X3), np.asarray(y3),
                                     np.asarray(reb3))
    assert np.allclose(float(loss3), ref_loss3, rtol=1e-5, atol=1e-5), (loss3, ref_loss3)
    assert np.allclose(np.asarray(new_reb3), ref_reb3, rtol=1e-5, atol=1e-6)

    # TODO(synk): the rebalance=False constructor path (per-element NLL output)
    # is not exposed here; only the default rebalance=True scalar-loss path is.
    print("KERNEL_OK")
</pallas_src>

<mosaic_0001>
module attributes {stable_mosaic.version = 11 : i64} {
  func.func @_gather_row_sum_kernel(%arg0: i32, %arg1: i32, %arg2: i32, %arg3: memref<2xi32, #tpu.memory_space<smem>>, %arg4: memref<1x1x2x128xf32, #tpu.memory_space<vmem>>, %arg5: memref<1x1x1x1xf32, #tpu.memory_space<vmem>>, %arg6: memref<2x128xf32, #tpu.memory_space<vmem>>) attributes {dimension_semantics = [#tpu.dimension_semantics<parallel>, #tpu.dimension_semantics<parallel>, #tpu.dimension_semantics<arbitrary>], iteration_bounds = array<i64: 1, 2, 1>, scalar_prefetch = 1 : i64, scratch_operands = 1 : i64, tpu.core_type = #tpu.core_type<tc>, window_params = [{transform_indices = @transform_0, window_bounds = array<i64: 1, 1, 2, 128>}, {transform_indices = @transform_1, window_bounds = array<i64: 1, 1, 1, 1>}]} {
    %c0_i32 = arith.constant 0 : i32
    %0 = arith.cmpi eq, %arg2, %c0_i32 : i32
    %1 = arith.extui %0 : i1 to i32
    %c0_i32_0 = arith.constant 0 : i32
    %2 = arith.cmpi ne, %1, %c0_i32_0 : i32
    scf.if %2 {
      %cst = arith.constant 0.000000e+00 : f32
      %11 = vector.broadcast %cst : f32 to vector<2x128xf32>
      %c0_10 = arith.constant 0 : index
      %c0_11 = arith.constant 0 : index
      %12 = vector.load %arg6[%c0_10, %c0_11] : memref<2x128xf32, #tpu.memory_space<vmem>>, vector<2x128xf32>
      tpu.vector_store %arg6[%c0_10, %c0_11], %11 {strides = array<i32>} : memref<2x128xf32, #tpu.memory_space<vmem>>, vector<2x128xf32>,
    } else {
    }
    %c0 = arith.constant 0 : index
    %c0_1 = arith.constant 0 : index
    %c0_2 = arith.constant 0 : index
    %c0_3 = arith.constant 0 : index
    %3 = vector.load %arg4[%c0, %c0_1, %c0_2, %c0_3] : memref<1x1x2x128xf32, #tpu.memory_space<vmem>>, vector<1x1x2x128xf32>
    %4 = vector.shape_cast %3 : vector<1x1x2x128xf32> to vector<2x128xf32>
    %c0_4 = arith.constant 0 : index
    %c0_5 = arith.constant 0 : index
    %5 = vector.load %arg6[%c0_4, %c0_5] : memref<2x128xf32, #tpu.memory_space<vmem>>, vector<2x128xf32>
    %6 = arith.addf %5, %4 : vector<2x128xf32>
    %c0_6 = arith.constant 0 : index
    %c0_7 = arith.constant 0 : index
    %7 = vector.load %arg6[%c0_6, %c0_7] : memref<2x128xf32, #tpu.memory_space<vmem>>, vector<2x128xf32>
    tpu.vector_store %arg6[%c0_6, %c0_7], %6 {strides = array<i32>} : memref<2x128xf32, #tpu.memory_space<vmem>>, vector<2x128xf32>,
    %c0_i32_8 = arith.constant 0 : i32
    %8 = arith.cmpi eq, %arg2, %c0_i32_8 : i32
    %9 = arith.extui %8 : i1 to i32
    %c0_i32_9 = arith.constant 0 : i32
    %10 = arith.cmpi ne, %9, %c0_i32_9 : i32
    scf.if %10 {
      %c0_10 = arith.constant 0 : index
      %c0_11 = arith.constant 0 : index
      %11 = vector.load %arg6[%c0_10, %c0_11] : memref<2x128xf32, #tpu.memory_space<vmem>>, vector<2x128xf32>
      %12 = vector.shape_cast %11 : vector<2x128xf32> to vector<1x2x128xf32>
      %cst = arith.constant dense<0.000000e+00> : vector<1xf32>
      %13 = vector.multi_reduction <add>, %12, %cst [1, 2] : vector<1x2x128xf32> to vector<1xf32>
      %14 = vector.shape_cast %13 : vector<1xf32> to vector<1x1x1xf32>
      %15 = vector.extract %14[0, 0, 0] : f32 from vector<1x1x1xf32>
      %16 = vector.broadcast %15 : f32 to vector<1x1xf32>
      %c0_12 = arith.constant 0 : index
      %c0_13 = arith.constant 0 : index
      %c0_14 = arith.constant 0 : index
      %c0_15 = arith.constant 0 : index
      %17 = vector.load %arg5[%c0_12, %c0_13, %c0_14, %c0_15] : memref<1x1x1x1xf32, #tpu.memory_space<vmem>>, vector<1x1x1x1xf32>
      %18 = vector.shape_cast %17 : vector<1x1x1x1xf32> to vector<1x1xf32>
      %19 = vector.shape_cast %16 : vector<1x1xf32> to vector<1x1x1x1xf32>
      tpu.vector_store %arg5[%c0_12, %c0_13, %c0_14, %c0_15], %19 {strides = array<i32>} : memref<1x1x1x1xf32, #tpu.memory_space<vmem>>, vector<1x1x1x1xf32>,
    } else {
    }
    return
  }
  func.func @transform_0(%arg0: i32, %arg1: i32, %arg2: i32, %arg3: memref<2xi32, #tpu.memory_space<smem>>) -> (i32, i32, i32, i32) {
    %c1_i32 = arith.constant 1 : i32
    %0 = arith.muli %arg0, %c1_i32 : i32
    %1 = arith.addi %0, %arg2 : i32
    %c0_i32 = arith.constant 0 : i32
    %2 = arith.minsi %1, %c0_i32 : i32
    %3 = arith.index_cast %arg1 : i32 to index
    %4 = memref.load %arg3[%3] : memref<2xi32, #tpu.memory_space<smem>>
    %c0_i32_0 = arith.constant 0 : i32
    %c0_i32_1 = arith.constant 0 : i32
    return %arg1, %4, %2, %c0_i32_0 : i32, i32, i32, i32
  }
  func.func @transform_1(%arg0: i32, %arg1: i32, %arg2: i32, %arg3: memref<2xi32, #tpu.memory_space<smem>>) -> (i32, i32, i32, i32) {
    %c0_i32 = arith.constant 0 : i32
    %c0_i32_0 = arith.constant 0 : i32
    %c0_i32_1 = arith.constant 0 : i32
    return %arg1, %arg0, %c0_i32, %c0_i32_0 : i32, i32, i32, i32
  }
}

</mosaic_0001>

<llo_original>
// kernel: balanced_ce_loss.1
$region0: #{balanced_ce_loss.1}
  #allocation0 [shape = 'u32[]', space=smem, size = 0x4, offset = 0x4, fixed_abs, tag = 'smem constant byte address 0x4 - core index']
  #allocation1 [shape = 'u32[144,128]{1,0:T(1,128)}', space=vmem, size = 0x12000, scoped, tag = 'internal scratch']
  #allocation2 [shape = 'f32[2,128]{1,0:T(2,128)}', space=vmem, size = 0x400, scoped, tag = 'scratch operand']
  #allocation3 [shape = 's32[1]{0}', space=sflag, size = 0x4, scoped, tag = 'scoped memory for balanced_ce_loss.1']
  #allocation4 [shape = 'u8[512]{0}', space=smem, size = 0x200, scoped, tag = 'prefetched SMEM operand 0']
  %s0 = inlined_call_operand.vmem [shape: s32[2], index: 0, kind: input, shape index: {}]
  %s1 = inlined_call_operand.vmem [shape: f32[2,4,2,128], index: 1, kind: input, shape index: {}]
  %s2 = inlined_call_operand.vmem [shape: f32[2,1,1,1], index: 2, kind: output, shape index: {}]
  %s3 = sld [smem:[#allocation0]]
  $region45: #{balanced_ce_loss.1} parent=0
    _
  %s5 = ssub.s32 1, %s3
  %s6 = scalar_select 0, %s5, %s3
  %s7 = sshll.u32 %s0, 4
  %s8 = int_to_ptr.vmem [resolvable:$true] %s7
  %10 = dma.vmem_to_smem %s8, 16, [#allocation4], [#allocation3]
  %11 = dma.done [#allocation3], 16
  %12 = sfence
  loop: start=0, step=1, limit=4
  $region2: #{balanced_ce_loss.1} parent=0 // loop_pre_header
    _
  $region3: #{balanced_ce_loss.1} parent=0 // loop_header
    %s14 = sphi 0, %s18
    %p15 = scmp.ge.s32.totalorder %s14, 4
    %s21 = sphi 0, %s40
    %s22 = sphi 0, %s36
    %s23 = sphi 0, %s32
    %s24 = sphi 0, %s21
    %s25 = sphi 0, %s22
    %s26 = sphi 0, %s23
    %s27 = sphi 0, %s24
    %s28 = sphi 0, %s25
    %s29 = sphi 0, %s26
    %s55 = sphi 0, %s57
    %s58 = sphi 0, %s55
    %s59 = sphi 0, %s58
    %s75 = sphi 0, %s59
    %s83 = sphi 0, %s85
    %s86 = sphi 0, %s83
    %s87 = sphi 0, %s86
    %s103 = sphi 0, %s87
  $region4: #{balanced_ce_loss.1} parent=0 // loop_header_branch
    %17 = sbr.rel (%p15) target = $region8
  $region5: #{balanced_ce_loss.1} parent=0 // loop_body
    %s19 = ssub.s32 %s14, 1
    %s20 = ssub.s32 %s14, 2
    %s30 = sadd.s32 1, %s23
    %p31 = scmp.ge.s32.totalorder %s30, 1
    %s32 = scalar_select %p31, 0, %s30
    %s33 = sadd.s32 1, %s22
    %s34 = scalar_select %p31, %s33, %s22
    %p35 = scmp.ge.s32.totalorder %s34, 2
    %s36 = scalar_select %p35, 0, %s34
    %s37 = sadd.s32 1, %s21
    %s38 = scalar_select %p35, %s37, %s21
    %p39 = scmp.ge.s32.totalorder %s38, 1
    %s40 = scalar_select %p39, 0, %s38
    %s41 = sadd.s32 %s21, %s23
    %p42 = scmp.lt.s32.totalorder %s41, 0
    %s43 = scalar_select %p42, %s41, 0
    %s44 = sld [smem:[#allocation4 + %s22]]
    %s45 = sadd.s32 %s40, %s32
    %p46 = scmp.lt.s32.totalorder %s45, 0
    %s47 = scalar_select %p46, %s45, 0
    %s48 = sld [smem:[#allocation4 + %s36]]
    %s49 = ssub.s32 %s22, %s36
    %s50 = ssub.s32 %s44, %s48
    %s51 = sor.u32 %s49, %s50
    %s52 = ssub.s32 %s43, %s47
    %s53 = sor.u32 %s51, %s52
    %p54 = scmp.eq.s32.totalorder %s53, 0
    %s56 = sadd.s32 %s55, 1
    %s57 = scalar_select %p54, %s55, %s56
    %p60 = pneg %p54
    %p61 = scmp.eq.s32.totalorder %s14, 1
    %p62 = por %p60, %p61
    %p63 = scmp.ne.s32.totalorder %s55, %s58
    %p64 = scmp.eq.s32.totalorder %s14, 0
    %p65 = por %p63, %p64
    %p66 = scmp.ne.s32.totalorder %s55, %s58
    %p67 = scmp.eq.s32.totalorder %s19, 1
    %p68 = por %p66, %p67
    %p69 = scmp.ne.s32.totalorder %s58, %s59
    %p70 = scmp.eq.s32.totalorder %s19, 0
    %p71 = por %p69, %p70
    %p72 = scmp.ne.s32.totalorder %s58, %s59
    %p73 = scmp.eq.s32.totalorder %s20, 1
    %p74 = por %p72, %p73
    %p76 = scmp.ne.s32.totalorder %s59, %s75
    %p77 = scmp.eq.s32.totalorder %s20, 0
    %p78 = por %p76, %p77
    %s79 = ssub.s32 %s22, %s36
    %s80 = ssub.s32 %s21, %s40
    %s81 = sor.u32 %s79, %s80
    %p82 = scmp.eq.s32.totalorder %s81, 0
    %s84 = sadd.s32 %s83, 1
    %s85 = scalar_select %p82, %s83, %s84
    %p88 = pneg %p82
    %p89 = scmp.eq.s32.totalorder %s14, 1
    %p90 = por %p88, %p89
    %p91 = scmp.ne.s32.totalorder %s83, %s86
    %p92 = scmp.eq.s32.totalorder %s14, 0
    %p93 = por %p91, %p92
    %p94 = scmp.ne.s32.totalorder %s83, %s86
    %p95 = scmp.eq.s32.totalorder %s19, 1
    %p96 = por %p94, %p95
    %p97 = scmp.ne.s32.totalorder %s86, %s87
    %p98 = scmp.eq.s32.totalorder %s19, 0
    %p99 = por %p97, %p98
    %p100 = scmp.ne.s32.totalorder %s86, %s87
    %p101 = scmp.eq.s32.totalorder %s20, 1
    %p102 = por %p100, %p101
    %p104 = scmp.ne.s32.totalorder %s87, %s103
    %p105 = scmp.eq.s32.totalorder %s20, 0
    %p106 = por %p104, %p105
    %p107 = scmp.le.s32.totalorder 1, %s14
    %p108 = scmp.lt.s32.totalorder %s14, 3
    %p109 = pnand %p107, %p108
    %p110 = pneg %p109
    // Predicated region
    $region9: #{balanced_ce_loss.1} parent=5 // pred_check
      _
    $region10: #{balanced_ce_loss.1} parent=5 // pred_check_branch
      %112 = sbr.rel (%p109) target = $region12
    $region11: #{balanced_ce_loss.1} parent=5 // pred_region
      %s113 = ssub.s32 %s14, 1
    $region12: #{balanced_ce_loss.1} parent=5 // pred_fallthru
      _
    %p114 = scmp.lt.s32.totalorder %s14, 2
    // Predicated region
    $region13: #{balanced_ce_loss.1} parent=5 // pred_check
      %p115 = pneg %p114
    $region14: #{balanced_ce_loss.1} parent=5 // pred_check_branch
      %117 = sbr.rel (%p115) target = $region16
    $region15: #{balanced_ce_loss.1} parent=5 // pred_region
      // Predicated region
      $region17: #{balanced_ce_loss.1} parent=15 // pred_check
        %p118 = pneg %p65
      $region18: #{balanced_ce_loss.1} parent=15 // pred_check_branch
        %120 = sbr.rel (%p118) target = $region20
      $region19: #{balanced_ce_loss.1} parent=15 // pred_region
        %s121 = sadd.s32 %s21, %s23
        %p122 = scmp.lt.s32.totalorder %s121, 0
        %s123 = scalar_select %p122, %s121, 0
        %s124 = sld [smem:[#allocation4 + %s22]]
        %p125 = scmp.lt.s32.totalorder %s22, 1
        %s126 = scalar_select %p125, %s22, 1
        %p127 = scmp.lt.s32.totalorder %s124, 3
        %s128 = scalar_select %p127, %s124, 3
        %p129 = scmp.lt.s32.totalorder %s123, 0
        %s130 = scalar_select %p129, %s123, 0
        %s131 = sadd.s32 %s130, %s128
        %s132 = smul.addr %s126, 4
        %s133 = sadd.s32 %s131, %s132
        %s134 = smul.addr %s133, 2
        %s135 = scalar_lea.vmem %s1, %s134
        %s136 = sadd.s32 %s21, %s23
        %p137 = scmp.lt.s32.totalorder %s136, 0
        %s138 = scalar_select %p137, %s136, 0
        %s139 = sld [smem:[#allocation4 + %s22]]
      $region20: #{balanced_ce_loss.1} parent=15 // pred_fallthru
        _
    $region16: #{balanced_ce_loss.1} parent=5 // pred_fallthru
      _
    %p140 = scmp.le.s32.totalorder 1, %s14
    %p141 = scmp.lt.s32.totalorder %s14, 3
    %p142 = pnand %p140, %p141
    %p143 = pneg %p142
    // Predicated region
    $region21: #{balanced_ce_loss.1} parent=5 // pred_check
      _
    $region22: #{balanced_ce_loss.1} parent=5 // pred_check_branch
      %145 = sbr.rel (%p142) target = $region24
    $region23: #{balanced_ce_loss.1} parent=5 // pred_region
      %s146 = ssub.s32 %s14, 1
      %s147 = sadd.s32 %s24, %s26
      %p148 = scmp.lt.s32.totalorder %s147, 0
      %s149 = scalar_select %p148, %s147, 0
      %s150 = sld [smem:[#allocation4 + %s25]]
      %p151 = scmp.lt.s32.totalorder %s25, 1
      %s152 = scalar_select %p151, %s25, 1
      %p153 = scmp.lt.s32.totalorder %s150, 3
      %s154 = scalar_select %p153, %s150, 3
      %p155 = scmp.lt.s32.totalorder %s149, 0
      %s156 = scalar_select %p155, %s149, 0
      %s157 = sadd.s32 %s156, %s154
      %s158 = smul.addr %s152, 4
      %s159 = sadd.s32 %s157, %s158
      %s160 = smul.addr %s159, 2
      %s161 = scalar_lea.vmem %s1, %s160
      %p162 = pneg %p71
      %p163 = pneg %p68
      %p164 = pneg %p99
      %p165 = pneg %p96
      %p166 = scmp.lt.s32.totalorder %s25, 1
      %s167 = scalar_select %p166, %s25, 1
      %p168 = scmp.lt.s32.totalorder %s24, 0
      %s169 = scalar_select %p168, %s24, 0
      %s170 = sadd.s32 %s169, %s167
      %s171 = scalar_lea.vmem %s2, %s170
      %s172 = sadd.s32 %s24, %s26
      %p173 = scmp.lt.s32.totalorder %s172, 0
      %s174 = scalar_select %p173, %s172, 0
      %s175 = sld [smem:[#allocation4 + %s25]]
      %p176 = scmp.lt.s32.totalorder %s25, 1
      %s177 = scalar_select %p176, %s25, 1
      %p178 = scmp.lt.s32.totalorder %s175, 3
      %s179 = scalar_select %p178, %s175, 3
      %p180 = scmp.lt.s32.totalorder %s174, 0
      %s181 = scalar_select %p180, %s174, 0
      %s182 = sadd.s32 %s181, %s179
      %s183 = smul.addr %s177, 4
      %s184 = sadd.s32 %s182, %s183
      %s185 = smul.addr %s184, 2
      %s186 = scalar_lea.vmem %s1, %s185
      %s187 = sadd.s32 %s24, %s26
      %p188 = scmp.lt.s32.totalorder %s187, 0
      %s189 = scalar_select %p188, %s187, 0
      %s190 = sld [smem:[#allocation4 + %s25]]
      %p191 = scmp.lt.s32.totalorder %s25, 1
      %s192 = scalar_select %p191, %s25, 1
      %p193 = scmp.lt.s32.totalorder %s24, 0
      %s194 = scalar_select %p193, %s24, 0
      %s195 = sadd.s32 %s194, %s192
      %s196 = scalar_lea.vmem %s2, %s195
      %p197 = scmp.eq.s32.totalorder %s26, 0
      // Predicated region
      $region25: #{balanced_ce_loss.1} parent=23 // pred_check
        %p198 = pneg %p197
      $region26: #{balanced_ce_loss.1} parent=23 // pred_check_branch
        %200 = sbr.rel (%p198) target = $region28
      $region27: #{balanced_ce_loss.1} parent=23 // pred_region
        %201 = vst [vmem:[#allocation2] sm:$0x3] 0.0
      $region28: #{balanced_ce_loss.1} parent=23 // pred_fallthru
        _
      %v202 = vld [vmem:[%s186] sm:$0x3]
      %v203 = vld [vmem:[#allocation2] sm:$0x3]
      %v204 = vadd.f32 %v203, %v202
      %205 = vst [vmem:[#allocation2] sm:$0x3] %v204
      // Predicated region
      $region29: #{balanced_ce_loss.1} parent=23 // pred_check
        %p206 = pneg %p197
      $region30: #{balanced_ce_loss.1} parent=23 // pred_check_branch
        %208 = sbr.rel (%p206) target = $region32
      $region31: #{balanced_ce_loss.1} parent=23 // pred_region
        %v209 = vld [vmem:[#allocation2] sm:$0x3]
        %vm210 = vcmask 1041408
        %v211 = vsel %vm210, %v209, 0.0
        %212 = vadd.xlane.f32.xlu0 %v211
        %v213 = vpop.xlane.xlu0 %212
        %v214 = vrot.slane %v213, 4
        %v215 = vadd.f32 %v213, %v214
        %v216 = vrot.slane %v215, 2
        %v217 = vadd.f32 %v215, %v216
        %v218 = vrot.slane %v217, 1
        %v219 = vadd.f32 %v217, %v218
        %s220 = vtos %v219
        %v221 = vstv %s220
        %vm222 = vcmask 0
        %223 = vst.msk [vmem:[%s196] sm:$0x1] %vm222, %v221
      $region32: #{balanced_ce_loss.1} parent=23 // pred_fallthru
        _
      %p224 = scmp.lt.s32.totalorder %s25, 1
      %s225 = scalar_select %p224, %s25, 1
      %p226 = scmp.lt.s32.totalorder %s24, 0
      %s227 = scalar_select %p226, %s24, 0
      %s228 = sadd.s32 %s227, %s225
      %s229 = scalar_lea.vmem %s2, %s228
      // Predicated region
      $region33: #{balanced_ce_loss.1} parent=23 // pred_check
        %p230 = pneg %p96
      $region34: #{balanced_ce_loss.1} parent=23 // pred_check_branch
        %232 = sbr.rel (%p230) target = $region36
      $region35: #{balanced_ce_loss.1} parent=23 // pred_region
        _
      $region36: #{balanced_ce_loss.1} parent=23 // pred_fallthru
        _
    $region24: #{balanced_ce_loss.1} parent=5 // pred_fallthru
      _
    %p233 = scmp.le.s32.totalorder 2, %s14
    // Predicated region
    $region37: #{balanced_ce_loss.1} parent=5 // pred_check
      %p234 = pneg %p233
    $region38: #{balanced_ce_loss.1} parent=5 // pred_check_branch
      %236 = sbr.rel (%p234) target = $region40
    $region39: #{balanced_ce_loss.1} parent=5 // pred_region
      %s237 = ssub.s32 %s14, 2
      // Predicated region
      $region41: #{balanced_ce_loss.1} parent=39 // pred_check
        %p238 = pneg %p102
      $region42: #{balanced_ce_loss.1} parent=39 // pred_check_branch
        %240 = sbr.rel (%p238) target = $region44
      $region43: #{balanced_ce_loss.1} parent=39 // pred_region
        %p241 = scmp.lt.s32.totalorder %s28, 1
        %s242 = scalar_select %p241, %s28, 1
        %p243 = scmp.lt.s32.totalorder %s27, 0
        %s244 = scalar_select %p243, %s27, 0
        %s245 = sadd.s32 %s244, %s242
        %s246 = scalar_lea.vmem %s2, %s245
      $region44: #{balanced_ce_loss.1} parent=39 // pred_fallthru
        _
    $region40: #{balanced_ce_loss.1} parent=5 // pred_fallthru
      _
  $region6: #{balanced_ce_loss.1} parent=0 // loop_footer
    %s18 = sadd.s32 1, %s14
  $region7: #{balanced_ce_loss.1} parent=0 // loop_footer_branch
    %13 = sbr.rel target = $region3
  $region8: #{balanced_ce_loss.1} parent=0 // loop_exit
    _

</llo_original>
